<compile_context>
chip_gen: v7x
topology: tpu7x:2x2x1
jax: 0.10.0
libtpu: 0.0.40
codegen_flags: <defaults>
</compile_context>

<pallas_src>
import functools
import math

import jax
import jax.numpy as jnp
from jax.experimental import pallas as pl
from jax.experimental.pallas import tpu as pltpu


# Target size of the resident pe block (one lane period).  Small enough that
# (double-)buffering it costs almost no VMEM; large enough that the in-kernel
# chunk loop stays short (~10-20 unrolled adds).
_PE_CHUNK_BYTES = 512 * 1024


def _spe_kernel(x_ref, pe_ref, o_ref, *, n_chunks: int, chunk_lanes: int):
    """x_ref/o_ref: (R, tT*D) tiles; pe_ref: (R, chunk_t*D) = one pe lane period.

    Static, lane-aligned chunk loop: each chunk is a full-sublane, 128-multiple
    lane slab -> unmasked vector loads/stores; the add stays on the VPU.
    """
    for c in range(n_chunks):
        sl = pl.ds(c * chunk_lanes, chunk_lanes)
        o_ref[:, sl] = x_ref[:, sl] + pe_ref[...]


def _pick_vmem_limit() -> int:
    """Generation-aware scoped-VMEM ceiling (leaves headroom below physical)."""
    try:
        cap = int(pltpu.get_tpu_info().vmem_capacity_bytes)
    except Exception:  # interpret mode / query unavailable: assume 128 MiB part
        cap = 128 << 20
    if cap <= (64 << 20):   # v7x: 64 MiB physical per TensorCore
        return 48 << 20
    return 64 << 20         # v5e / v6e: 128 MiB physical


def _choose_tiles(rows: int, M: int, T: int, D: int, itemsize: int,
                  vmem_limit_bytes: int):
    """Pick (R rows per block, tT time steps per block, chunk_t pe period)."""
    # Lane alignment: a partial lane-axis block must be a multiple of 128 elems,
    # so time tiles are multiples of lane_step (=> tT*D % 128 == 0).
    lane_step = 128 // math.gcd(D, 128)
    # Row tile: lcm(M, 8) -> full 8-sublane groups AND an integer number of pe
    # periods, so the constant-index pe block lines up inside every row block.
    R_base = (M * 8) // math.gcd(M, 8)
    R = rows if R_base >= rows else R_base
    bytes_per_t = R * D * itemsize

    # pe chunk (time steps covered by the small resident pe block).
    chunk_t = max(lane_step,
                  (_PE_CHUNK_BYTES // bytes_per_t) // lane_step * lane_step)
    if chunk_t >= T:
        chunk_t = T

    # x/out block byte budget: assume (worst case) 6 resident block-sized
    # buffers (x, out double-buffered + pe) inside ~85% of the scoped limit.
    usable = int(vmem_limit_bytes * 0.85)
    x_target = max(bytes_per_t * chunk_t, usable // 6)

    # Time tile: largest multiple of chunk_t under the budget.
    tT = max(chunk_t, (x_target // bytes_per_t) // chunk_t * chunk_t)
    if tT >= T:
        # Whole time extent per block only if the chunk loop tiles it exactly;
        # otherwise leave a ragged last time block.
        tT = T if T % chunk_t == 0 else max(chunk_t, (T // chunk_t) * chunk_t)
        if tT == T and R < rows:
            # Small-T case with budget to spare: pack more pe-period row groups
            # per block -> fewer grid steps (less ~0.35 us/step overhead).
            r_mult = max(1, x_target // max(1, R_base * T * D * itemsize))
            R = min(rows, r_mult * R_base)
    return R, tT, chunk_t


def spatial_positional_encoding(x: jax.Array, pe: jax.Array,
                                *, donate_x: bool = False) -> jax.Array:
    """x: (B, M, T, D), pe: (1, M, 1, D)  ->  (B, M, T, D) == x + pe."""
    B, M, T, D = x.shape
    assert pe.shape == (1, M, 1, D), pe.shape

    # Match PyTorch type promotion (e.g. bf16 x + f32 pe -> f32 output).
    out_dtype = jnp.result_type(x.dtype, pe.dtype)
    itemsize = jnp.dtype(out_dtype).itemsize
    rows = B * M

    vmem_limit = _pick_vmem_limit()
    R, tT, chunk_t = _choose_tiles(rows, M, T, D, itemsize, vmem_limit)
    assert R % M == 0 and tT % chunk_t == 0

    lanes = tT * D
    chunk_lanes = chunk_t * D
    n_chunks = tT // chunk_t
    n_r = pl.cdiv(rows, R)
    n_t = pl.cdiv(T, tT)

    # Free reshape: merges (B, M) into rows and (T, D) into a lane-dense axis.
    x_flat = x.reshape(rows, T * D)

    # pe block: R rows (R/M pe periods) x chunk_t time steps.  Tiny (<=~512 KiB),
    # so this per-call materialization is negligible; in a jitted model XLA can
    # also hoist/CSE it since pe is a constant parameter.
    pe_tile = jnp.tile(
        pe.reshape(M, D).astype(out_dtype)[None, :, None, :],
        (R // M, 1, chunk_t, 1),
    ).reshape(R, chunk_lanes)

    kernel = functools.partial(_spe_kernel, n_chunks=n_chunks,
                               chunk_lanes=chunk_lanes)

    # In-place add (drops the output HBM allocation) when the caller donates x
    # and no dtype promotion is needed.
    aliases = {0: 0} if (donate_x and x.dtype == out_dtype) else {}

    out_flat = pl.pallas_call(
        kernel,
        out_shape=jax.ShapeDtypeStruct((rows, T * D), out_dtype),
        grid_spec=pltpu.PrefetchScalarGridSpec(
            num_scalar_prefetch=0,
            grid=(n_r, n_t),   # time axis last -> contiguous HBM streaming
            in_specs=[
                # one (row-block, time-block) slab of x per grid step
                pl.BlockSpec((R, lanes), lambda r, t: (r, t)),
                # small constant pe block: DMA'd once, never re-fetched
                pl.BlockSpec((R, chunk_lanes), lambda r, t: (0, 0)),
            ],
            out_specs=pl.BlockSpec((R, lanes), lambda r, t: (r, t)),
        ),
        compiler_params=pltpu.CompilerParams(
            dimension_semantics=("parallel", "parallel"),
            vmem_limit_bytes=vmem_limit,
        ),
        cost_estimate=pl.CostEstimate(
            flops=rows * T * D,
            transcendentals=0,
            bytes_accessed=2 * rows * T * D * itemsize
            + R * chunk_lanes * itemsize,
        ),
        input_output_aliases=aliases,
    )(x_flat, pe_tile)

    return out_flat.reshape(B, M, T, D)


if __name__ == "__main__":
    key = jax.random.PRNGKey(0)
    kx, kpe, kx2, kpe2 = jax.random.split(key, 4)

    # Small shapes consistent with the module: batch=2, n_mic=4, seq=8, d_model=32.
    B, n_mic, T, d_model = 2, 4, 8, 32
    x = jax.random.normal(kx, (B, n_mic, T, d_model), dtype=jnp.float32)
    pe = jax.random.normal(kpe, (1, n_mic, 1, d_model), dtype=jnp.float32)

    out = jax.block_until_ready(spatial_positional_encoding(x, pe))
    ref = x + pe
    assert out.shape == x.shape and out.dtype == x.dtype
    assert jnp.allclose(out, ref, atol=1e-6, rtol=1e-6)

    # Longer sequence: exercises multiple time blocks, the ragged last block,
    # and the in-kernel pe chunk sweep.
    T2 = 6000
    x2 = jax.random.normal(kx2, (B, n_mic, T2, d_model), dtype=jnp.float32)
    pe2 = jax.random.normal(kpe2, (1, n_mic, 1, d_model), dtype=jnp.float32)

    out2 = jax.block_until_ready(spatial_positional_encoding(x2, pe2))
    ref2 = x2 + pe2
    assert out2.shape == x2.shape and out2.dtype == x2.dtype
    assert jnp.allclose(out2, ref2, atol=1e-6, rtol=1e-6)

    print("KERNEL_OK")
</pallas_src>

<mosaic_0001>
module attributes {stable_mosaic.version = 11 : i64} {
  func.func @_spe_kernel(%arg0: i32, %arg1: i32, %arg2: memref<8x256xf32, #tpu.memory_space<vmem>>, %arg3: memref<8x256xf32, #tpu.memory_space<vmem>>, %arg4: memref<8x256xf32, #tpu.memory_space<vmem>>) attributes {dimension_semantics = [#tpu.dimension_semantics<parallel>, #tpu.dimension_semantics<parallel>], iteration_bounds = array<i64: 1, 1>, scalar_prefetch = 0 : i64, scratch_operands = 0 : i64, tpu.core_type = #tpu.core_type<tc>, window_params = [{transform_indices = @transform_0, window_bounds = array<i64: 8, 256>}, {pipeline_mode = #tpu.pipeline_mode<synchronous>, transform_indices = @transform_1, window_bounds = array<i64: 8, 256>}, {transform_indices = @transform_2, window_bounds = array<i64: 8, 256>}]} {
    %c0 = arith.constant 0 : index
    %c0_0 = arith.constant 0 : index
    %0 = vector.load %arg2[%c0, %c0_0] : memref<8x256xf32, #tpu.memory_space<vmem>>, vector<8x256xf32>
    %c0_1 = arith.constant 0 : index
    %c0_2 = arith.constant 0 : index
    %1 = vector.load %arg3[%c0_1, %c0_2] : memref<8x256xf32, #tpu.memory_space<vmem>>, vector<8x256xf32>
    %2 = arith.addf %0, %1 : vector<8x256xf32>
    %c0_3 = arith.constant 0 : index
    %c0_4 = arith.constant 0 : index
    %3 = vector.load %arg4[%c0_3, %c0_4] : memref<8x256xf32, #tpu.memory_space<vmem>>, vector<8x256xf32>
    tpu.vector_store %arg4[%c0_3, %c0_4], %2 {strides = array<i32>} : memref<8x256xf32, #tpu.memory_space<vmem>>, vector<8x256xf32>,
    return
  }
  func.func @transform_0(%arg0: i32, %arg1: i32) -> (i32, i32) {
    %c0_i32 = arith.constant 0 : i32
    return %arg0, %arg1 : i32, i32
  }
  func.func @transform_1(%arg0: i32, %arg1: i32) -> (i32, i32) {
    %c0_i32 = arith.constant 0 : i32
    %c0_i32_0 = arith.constant 0 : i32
    %c0_i32_1 = arith.constant 0 : i32
    return %c0_i32, %c0_i32_0 : i32, i32
  }
  func.func @transform_2(%arg0: i32, %arg1: i32) -> (i32, i32) {
    %c0_i32 = arith.constant 0 : i32
    return %arg0, %arg1 : i32, i32
  }
}

</mosaic_0001>

<llo_original>
// kernel: tpu_custom_call.1
$region0: #{tpu_custom_call.1}
  #allocation0 [shape = 'u32[]', space=smem, size = 0x4, offset = 0x4, fixed_abs, tag = 'smem constant byte address 0x4 - core index']
  #allocation1 [shape = 'u32[144,128]{1,0:T(1,128)}', space=vmem, size = 0x12000, scoped, tag = 'internal scratch']
  %s0 = inlined_call_operand.hbm [shape: f32[8,256], index: 0, kind: input, shape index: {}]
  %s1 = inlined_call_operand.hbm [shape: f32[8,256], index: 1, kind: input, shape index: {}]
  %s2 = inlined_call_operand.hbm [shape: f32[8,256], index: 2, kind: output, shape index: {}]
  %s3 = sld [smem:[#allocation0]]
  $region26: #{tpu_custom_call.1} parent=0
    _
  %s5 = ssub.s32 1, %s3
  %s6 = scalar_select 0, %s5, %s3
  $region1: #{tpu_custom_call.1} parent=0
    #allocation2 [shape = 'u8[8192]{0}', space=vmem, size = 0x2000, scoped, tag = 'input window, operand 0, single buffered']
    #allocation3 [shape = 's32[1]{0}', space=sflag, size = 0x4, scoped, tag = 'scoped memory for tpu_custom_call.1']
    #allocation4 [shape = 's32[1]{0}', space=sflag, size = 0x4, scoped, tag = 'scoped memory for tpu_custom_call.1']
    #allocation5 [shape = 'u8[8192]{0}', space=vmem, size = 0x2000, scoped, tag = 'input window, operand 1, single buffered']
    #allocation6 [shape = 's32[1]{0}', space=sflag, size = 0x4, scoped, tag = 'scoped memory for tpu_custom_call.1']
    #allocation7 [shape = 'u8[8192]{0}', space=vmem, size = 0x2000, scoped, tag = 'output window, operand 0, single buffered']
    %7 = vsyncpa [#allocation3], 0
    %8 = vsyncpa [#allocation6], 0
    %9 = vsyncpa [#allocation4], 0
    // Predicated region
    $region2: #{tpu_custom_call.1} parent=1 // pred_check
      _
    $region3: #{tpu_custom_call.1} parent=1 // pred_check_branch
      %11 = sbr.rel (0) target = $region5
    $region4: #{tpu_custom_call.1} parent=1 // pred_region
      %s13 = ssub.s32 256, 256
      %14 = vsyncadd [#allocation3], %s13
      %s16 = sshll.u32 [#allocation2], 4
      %s17 = int_to_ptr.vmem [resolvable:$true] %s16
      %19 = dma.hbm_to_vmem [thread:$0]  %s0, 256, %s17, [#allocation3]
    $region5: #{tpu_custom_call.1} parent=1 // pred_fallthru
      _
    // Predicated region
    $region6: #{tpu_custom_call.1} parent=1 // pred_check
      _
    $region7: #{tpu_custom_call.1} parent=1 // pred_check_branch
      %21 = sbr.rel (0) target = $region9
    $region8: #{tpu_custom_call.1} parent=1 // pred_region
      %s23 = ssub.s32 256, 256
      %24 = vsyncadd [#allocation6], %s23
      %s26 = sshll.u32 [#allocation5], 4
      %s27 = int_to_ptr.vmem [resolvable:$true] %s26
      %29 = dma.hbm_to_vmem [thread:$0]  %s1, 256, %s27, [#allocation6]
    $region9: #{tpu_custom_call.1} parent=1 // pred_fallthru
      _
    // Predicated region
    $region10: #{tpu_custom_call.1} parent=1 // pred_check
      _
    $region11: #{tpu_custom_call.1} parent=1 // pred_check_branch
      %31 = sbr.rel (0) target = $region13
    $region12: #{tpu_custom_call.1} parent=1 // pred_region
      %32 = dma.done [#allocation3], 256
    $region13: #{tpu_custom_call.1} parent=1 // pred_fallthru
      _
    // Predicated region
    $region14: #{tpu_custom_call.1} parent=1 // pred_check
      _
    $region15: #{tpu_custom_call.1} parent=1 // pred_check_branch
      %34 = sbr.rel (0) target = $region17
    $region16: #{tpu_custom_call.1} parent=1 // pred_region
      %35 = dma.done [#allocation6], 256
    $region17: #{tpu_custom_call.1} parent=1 // pred_fallthru
      _
    %v36 = vld [vmem:[#allocation2] sm:$0xff]
    %v37 = vld [vmem:[#allocation2 + $0x8] sm:$0xff]
    %v38 = vld [vmem:[#allocation5] sm:$0xff]
    %v39 = vld [vmem:[#allocation5 + $0x8] sm:$0xff]
    %v40 = vadd.f32 %v36, %v38
    %v41 = vadd.f32 %v37, %v39
    %42 = vst [vmem:[#allocation7] sm:$0xff] %v40
    %43 = vst [vmem:[#allocation7 + $0x8] sm:$0xff] %v41
    // Predicated region
    $region18: #{tpu_custom_call.1} parent=1 // pred_check
      _
    $region19: #{tpu_custom_call.1} parent=1 // pred_check_branch
      %45 = sbr.rel (0) target = $region21
    $region20: #{tpu_custom_call.1} parent=1 // pred_region
      %s47 = ssub.s32 256, 256
      %48 = vsyncadd [#allocation4], %s47
      %s50 = sshll.u32 [#allocation7], 4
      %s51 = int_to_ptr.vmem [resolvable:$true] %s50
      %53 = dma.vmem_to_hbm [thread:$0]  %s51, 256, %s2, [#allocation4]
    $region21: #{tpu_custom_call.1} parent=1 // pred_fallthru
      _
    // Predicated region
    $region22: #{tpu_custom_call.1} parent=1 // pred_check
      _
    $region23: #{tpu_custom_call.1} parent=1 // pred_check_branch
      %55 = sbr.rel (0) target = $region25
    $region24: #{tpu_custom_call.1} parent=1 // pred_region
      %56 = dma.done [#allocation4], 256
    $region25: #{tpu_custom_call.1} parent=1 // pred_fallthru
      _
    %57 = vsyncpa [#allocation3], 1
    %58 = vsyncpa [#allocation6], 1
    %59 = vsyncpa [#allocation4], 1

</llo_original>
